<compile_context>
chip_gen: v7x
topology: tpu7x:2x2x1
jax: 0.10.0
libtpu: 0.0.40
codegen_flags: <defaults>
</compile_context>

<pallas_src>
import functools

import jax
import jax.numpy as jnp
from jax.experimental import pallas as pl
from jax.experimental.pallas import tpu as pltpu

_LANE = 512            # lane-dense block width (multiple of 128)
_MAX_TILE_ROWS = 2048  # (2048, 512) f32 block = 4 MiB -> 2 in x 2 buf = 16 MiB


def _round_up(x, m):
    return -(-x // m) * m


def _shrinkage_loss_kernel(pred_ref, tgt_ref, out_ref, *, mode, a, c):
    # out_ref is a (1, 1, LANE) per-split partial-sum block; it keeps the same
    # block index across the inner ("arbitrary") grid axis, so it stays
    # resident in VMEM and acts as the accumulator.
    @pl.when(pl.program_id(1) == 0)
    def _init():
        out_ref[...] = jnp.zeros_like(out_ref)

    p = pred_ref[...].astype(jnp.float32)
    t = tgt_ref[...].astype(jnp.float32)

    l = jnp.abs(p - t)
    if mode == "prediction":
        # Exact divide (padded targets are 1.0, so padded elements stay finite
        # and contribute exactly 0); only the sigmoid uses the approx recip.
        l = l / t
    elif mode != "pretrain":
        raise ValueError(f"unsupported mode: {mode}")

    # loss = l^2 / (1 + exp(a*(c - l)));  exp + approx reciprocal -> EUP slot.
    sig = pl.reciprocal(1.0 + jnp.exp(a * c - a * l), approx=True)
    loss = (l * l) * sig

    # Sublane reduce of the whole tile (XLU) into the tiny resident output.
    partial = jnp.sum(loss, axis=0, keepdims=True)        # (1, LANE)
    out_ref[...] += partial.reshape(1, 1, partial.shape[-1])


def shrinkage_loss(predicts, targets, *, mode="pretrain", a=0.2, c=1.0):
    """Pallas TPU implementation of ShrinkageLoss.forward.

    predicts, targets: same-shape arrays (nominally [batch, horizon]).
    Returns a float32 scalar (the mean shrinkage loss).
    """
    assert predicts.shape == targets.shape, "predicts/targets shape mismatch"
    if mode not in ("pretrain", "prediction"):
        raise ValueError(f"unsupported mode: {mode}")

    n = 1
    for d in predicts.shape:
        n *= d

    # Lane-dense tiling: flatten -> pad with 1.0 -> (rows_pad, 512).
    rows = pl.cdiv(n, _LANE)
    n_tiles = pl.cdiv(rows, _MAX_TILE_ROWS)
    num_splits = 2 if n_tiles >= 2 else 1            # v7x: 2 TensorCores
    n_tiles = _round_up(n_tiles, num_splits)
    tile_rows = _round_up(pl.cdiv(rows, n_tiles), 8)  # sublane multiple
    rows_pad = tile_rows * n_tiles
    n_pad = rows_pad * _LANE
    steps = n_tiles // num_splits

    def _prep(x):
        flat = x.reshape(-1)
        if n_pad != n:
            # pred == tgt == 1.0 on padding -> loss exactly 0 in both modes.
            flat = jnp.pad(flat, (0, n_pad - n), constant_values=1.0)
        return flat.reshape(rows_pad, _LANE)

    kernel = functools.partial(
        _shrinkage_loss_kernel, mode=mode, a=float(a), c=float(c))

    partials = pl.pallas_call(
        kernel,
        out_shape=jax.ShapeDtypeStruct((num_splits, 1, _LANE), jnp.float32),
        grid=(num_splits, steps),
        in_specs=[
            pl.BlockSpec((tile_rows, _LANE), lambda o, k: (o * steps + k, 0)),
            pl.BlockSpec((tile_rows, _LANE), lambda o, k: (o * steps + k, 0)),
        ],
        out_specs=pl.BlockSpec((1, 1, _LANE), lambda o, k: (o, 0, 0)),
        compiler_params=pltpu.CompilerParams(
            dimension_semantics=("parallel", "arbitrary"),
            vmem_limit_bytes=32 * 1024 * 1024,
        ),
    )(_prep(predicts), _prep(targets))

    # Final cross-lane reduction (<= 2*512 partials) + mean divisor in XLA.
    return jnp.sum(partials) * (1.0 / float(n))


def _shrinkage_loss_ref(predicts, targets, *, mode="pretrain", a=0.2, c=1.0):
    p = predicts.astype(jnp.float32)
    t = targets.astype(jnp.float32)
    l = jnp.abs(p - t)
    if mode == "prediction":
        l = l / t
    return jnp.mean(l * l / (1.0 + jnp.exp(a * (c - l))))


if __name__ == "__main__":
    key = jax.random.PRNGKey(0)
    ok = True

    # [batchsize, horizon] per the module docstring. First shape is the small
    # canonical case; second exercises padding + multi-row tiles.
    for (batch, horizon) in [(2, 8), (100, 24)]:
        key, k1, k2 = jax.random.split(key, 3)
        # Positive synthetic "glucose levels" so 'prediction' mode (divide by
        # the raw target, same as the PyTorch ref) is well-defined.
        targets = jax.random.uniform(k1, (batch, horizon), jnp.float32, 3.0, 10.0)
        predicts = targets + jax.random.normal(k2, (batch, horizon), jnp.float32)

        for mode in ("pretrain", "prediction"):
            out = jax.block_until_ready(shrinkage_loss(predicts, targets, mode=mode))
            ref = _shrinkage_loss_ref(predicts, targets, mode=mode)
            if not jnp.allclose(out, ref, rtol=5e-3, atol=1e-6):
                ok = False
                print(f"MISMATCH shape=({batch},{horizon}) mode={mode}: "
                      f"kernel={out} ref={ref}")

    if ok:
        print("KERNEL_OK")
</pallas_src>

<mosaic_0001>
module attributes {stable_mosaic.version = 11 : i64} {
  func.func @_shrinkage_loss_kernel(%arg0: i32, %arg1: i32, %arg2: memref<8x512xf32, #tpu.memory_space<vmem>>, %arg3: memref<8x512xf32, #tpu.memory_space<vmem>>, %arg4: memref<1x1x512xf32, #tpu.memory_space<vmem>>) attributes {dimension_semantics = [#tpu.dimension_semantics<parallel>, #tpu.dimension_semantics<arbitrary>], iteration_bounds = array<i64: 1, 1>, scalar_prefetch = 0 : i64, scratch_operands = 0 : i64, tpu.core_type = #tpu.core_type<tc>, window_params = [{transform_indices = @transform_0, window_bounds = array<i64: 8, 512>}, {transform_indices = @transform_1, window_bounds = array<i64: 8, 512>}, {transform_indices = @transform_2, window_bounds = array<i64: 1, 1, 512>}]} {
    %c0_i32 = arith.constant 0 : i32
    %0 = arith.cmpi eq, %arg1, %c0_i32 : i32
    %1 = arith.extui %0 : i1 to i32
    %c0_i32_0 = arith.constant 0 : i32
    %2 = arith.cmpi ne, %1, %c0_i32_0 : i32
    scf.if %2 {
      %cst_13 = arith.constant 0.000000e+00 : f32
      %23 = vector.broadcast %cst_13 : f32 to vector<1x1x512xf32>
      %c0_14 = arith.constant 0 : index
      %c0_15 = arith.constant 0 : index
      %c0_16 = arith.constant 0 : index
      %24 = vector.load %arg4[%c0_14, %c0_15, %c0_16] : memref<1x1x512xf32, #tpu.memory_space<vmem>>, vector<1x1x512xf32>
      tpu.vector_store %arg4[%c0_14, %c0_15, %c0_16], %23 {strides = array<i32>} : memref<1x1x512xf32, #tpu.memory_space<vmem>>, vector<1x1x512xf32>,
    } else {
    }
    %c0 = arith.constant 0 : index
    %c0_1 = arith.constant 0 : index
    %3 = vector.load %arg2[%c0, %c0_1] : memref<8x512xf32, #tpu.memory_space<vmem>>, vector<8x512xf32>
    %c0_2 = arith.constant 0 : index
    %c0_3 = arith.constant 0 : index
    %4 = vector.load %arg3[%c0_2, %c0_3] : memref<8x512xf32, #tpu.memory_space<vmem>>, vector<8x512xf32>
    %5 = arith.subf %3, %4 : vector<8x512xf32>
    %6 = math.absf %5 : vector<8x512xf32>
    %cst = arith.constant 2.000000e-01 : f32
    %7 = vector.broadcast %cst : f32 to vector<8x512xf32>
    %8 = arith.mulf %7, %6 : vector<8x512xf32>
    %cst_4 = arith.constant 2.000000e-01 : f32
    %9 = vector.broadcast %cst_4 : f32 to vector<8x512xf32>
    %10 = arith.subf %9, %8 : vector<8x512xf32>
    %11 = math.exp %10 : vector<8x512xf32>
    %cst_5 = arith.constant 1.000000e+00 : f32
    %12 = vector.broadcast %cst_5 : f32 to vector<8x512xf32>
    %13 = arith.addf %12, %11 : vector<8x512xf32>
    %14 = tpu.reciprocal %13 {approx = true} : vector<8x512xf32> -> vector<8x512xf32>
    %15 = arith.mulf %6, %6 : vector<8x512xf32>
    %16 = arith.mulf %15, %14 : vector<8x512xf32>
    %cst_6 = arith.constant dense<0.000000e+00> : vector<512xf32>
    %17 = vector.multi_reduction <add>, %16, %cst_6 [0] : vector<8x512xf32> to vector<512xf32>
    %18 = vector.shape_cast %17 : vector<512xf32> to vector<1x512xf32>
    %c0_7 = arith.constant 0 : index
    %c0_8 = arith.constant 0 : index
    %c0_9 = arith.constant 0 : index
    %19 = vector.load %arg4[%c0_7, %c0_8, %c0_9] : memref<1x1x512xf32, #tpu.memory_space<vmem>>, vector<1x1x512xf32>
    %20 = vector.shape_cast %18 : vector<1x512xf32> to vector<1x1x512xf32>
    %21 = arith.addf %19, %20 : vector<1x1x512xf32>
    %c0_10 = arith.constant 0 : index
    %c0_11 = arith.constant 0 : index
    %c0_12 = arith.constant 0 : index
    %22 = vector.load %arg4[%c0_10, %c0_11, %c0_12] : memref<1x1x512xf32, #tpu.memory_space<vmem>>, vector<1x1x512xf32>
    tpu.vector_store %arg4[%c0_10, %c0_11, %c0_12], %21 {strides = array<i32>} : memref<1x1x512xf32, #tpu.memory_space<vmem>>, vector<1x1x512xf32>,
    return
  }
  func.func @transform_0(%arg0: i32, %arg1: i32) -> (i32, i32) {
    %c1_i32 = arith.constant 1 : i32
    %0 = arith.muli %arg0, %c1_i32 : i32
    %1 = arith.addi %0, %arg1 : i32
    %c0_i32 = arith.constant 0 : i32
    %c0_i32_0 = arith.constant 0 : i32
    return %1, %c0_i32 : i32, i32
  }
  func.func @transform_1(%arg0: i32, %arg1: i32) -> (i32, i32) {
    %c1_i32 = arith.constant 1 : i32
    %0 = arith.muli %arg0, %c1_i32 : i32
    %1 = arith.addi %0, %arg1 : i32
    %c0_i32 = arith.constant 0 : i32
    %c0_i32_0 = arith.constant 0 : i32
    return %1, %c0_i32 : i32, i32
  }
  func.func @transform_2(%arg0: i32, %arg1: i32) -> (i32, i32, i32) {
    %c0_i32 = arith.constant 0 : i32
    %c0_i32_0 = arith.constant 0 : i32
    %c0_i32_1 = arith.constant 0 : i32
    return %arg0, %c0_i32, %c0_i32_0 : i32, i32, i32
  }
}

</mosaic_0001>

<llo_original>
// kernel: tpu_custom_call.1
$region0: #{tpu_custom_call.1}
  #allocation0 [shape = 'u32[]', space=smem, size = 0x4, offset = 0x4, fixed_abs, tag = 'smem constant byte address 0x4 - core index']
  #allocation1 [shape = 'u32[144,128]{1,0:T(1,128)}', space=vmem, size = 0x12000, scoped, tag = 'internal scratch']
  %s0 = inlined_call_operand.hbm [shape: f32[8,512], index: 0, kind: input, shape index: {}]
  %s1 = inlined_call_operand.hbm [shape: f32[8,512], index: 1, kind: input, shape index: {}]
  %s2 = inlined_call_operand.hbm [shape: f32[1,1,512], index: 2, kind: output, shape index: {}]
  %s3 = sld [smem:[#allocation0]]
  $region30: #{tpu_custom_call.1} parent=0
    _
  %s5 = ssub.s32 1, %s3
  %s6 = scalar_select 0, %s5, %s3
  $region1: #{tpu_custom_call.1} parent=0
    #allocation2 [shape = 'u8[16384]{0}', space=vmem, size = 0x4000, scoped, tag = 'input window, operand 0, single buffered']
    #allocation3 [shape = 's32[1]{0}', space=sflag, size = 0x4, scoped, tag = 'scoped memory for tpu_custom_call.1']
    #allocation4 [shape = 's32[1]{0}', space=sflag, size = 0x4, scoped, tag = 'scoped memory for tpu_custom_call.1']
    #allocation5 [shape = 'u8[16384]{0}', space=vmem, size = 0x4000, scoped, tag = 'input window, operand 1, single buffered']
    #allocation6 [shape = 's32[1]{0}', space=sflag, size = 0x4, scoped, tag = 'scoped memory for tpu_custom_call.1']
    #allocation7 [shape = 'u8[2048]{0}', space=vmem, size = 0x800, scoped, tag = 'output window, operand 0, single buffered']
    %7 = vsyncpa [#allocation3], 0
    %8 = vsyncpa [#allocation6], 0
    %9 = vsyncpa [#allocation4], 0
    // Predicated region
    $region2: #{tpu_custom_call.1} parent=1 // pred_check
      _
    $region3: #{tpu_custom_call.1} parent=1 // pred_check_branch
      %11 = sbr.rel (0) target = $region5
    $region4: #{tpu_custom_call.1} parent=1 // pred_region
      %s12 = sadd.s32 0, 0
      %s14 = ssub.s32 512, 512
      %15 = vsyncadd [#allocation3], %s14
      %s16 = smul.addr %s12, 4
      %s17 = smul.addr %s16, 128
      %s18 = scalar_lea.hbm %s0, %s17
      %s20 = sshll.u32 [#allocation2], 4
      %s21 = int_to_ptr.vmem [resolvable:$true] %s20
      %23 = dma.hbm_to_vmem [thread:$0]  %s18, 512, %s21, [#allocation3]
    $region5: #{tpu_custom_call.1} parent=1 // pred_fallthru
      _
    // Predicated region
    $region6: #{tpu_custom_call.1} parent=1 // pred_check
      _
    $region7: #{tpu_custom_call.1} parent=1 // pred_check_branch
      %25 = sbr.rel (0) target = $region9
    $region8: #{tpu_custom_call.1} parent=1 // pred_region
      %s26 = sadd.s32 0, 0
      %s28 = ssub.s32 512, 512
      %29 = vsyncadd [#allocation6], %s28
      %s30 = smul.addr %s26, 4
      %s31 = smul.addr %s30, 128
      %s32 = scalar_lea.hbm %s1, %s31
      %s34 = sshll.u32 [#allocation5], 4
      %s35 = int_to_ptr.vmem [resolvable:$true] %s34
      %37 = dma.hbm_to_vmem [thread:$0]  %s32, 512, %s35, [#allocation6]
    $region9: #{tpu_custom_call.1} parent=1 // pred_fallthru
      _
    // Predicated region
    $region10: #{tpu_custom_call.1} parent=1 // pred_check
      _
    $region11: #{tpu_custom_call.1} parent=1 // pred_check_branch
      %39 = sbr.rel (0) target = $region13
    $region12: #{tpu_custom_call.1} parent=1 // pred_region
      %40 = dma.done [#allocation3], 512
    $region13: #{tpu_custom_call.1} parent=1 // pred_fallthru
      _
    // Predicated region
    $region14: #{tpu_custom_call.1} parent=1 // pred_check
      _
    $region15: #{tpu_custom_call.1} parent=1 // pred_check_branch
      %42 = sbr.rel (0) target = $region17
    $region16: #{tpu_custom_call.1} parent=1 // pred_region
      %43 = dma.done [#allocation6], 512
    $region17: #{tpu_custom_call.1} parent=1 // pred_fallthru
      _
    %s44 = sadd.s32 0, 0
    %s45 = sadd.s32 0, 0
    %p46 = scmp.eq.s32.totalorder 0, 0
    // Predicated region
    $region18: #{tpu_custom_call.1} parent=1 // pred_check
      %p47 = pneg %p46
    $region19: #{tpu_custom_call.1} parent=1 // pred_check_branch
      %49 = sbr.rel (%p47) target = $region21
    $region20: #{tpu_custom_call.1} parent=1 // pred_region
      %v50 = vlaneseq
      %vm51 = vcmp.ge.s32.totalorder %v50, 0
      %vm52 = vcmp.lt.s32.totalorder %v50, 512
      %vm53 = vmand %vm51, %vm52
      %54 = vst.msk [vmem:[#allocation7] sm:$0xf] %vm53, 0.0
    $region21: #{tpu_custom_call.1} parent=1 // pred_fallthru
      _
    %v55 = vld [vmem:[#allocation2] sm:$0xff]
    %v56 = vld [vmem:[#allocation2 + $0x8] sm:$0xff]
    %v57 = vld [vmem:[#allocation2 + $0x10] sm:$0xff]
    %v58 = vld [vmem:[#allocation2 + $0x18] sm:$0xff]
    %v59 = vld [vmem:[#allocation5] sm:$0xff]
    %v60 = vld [vmem:[#allocation5 + $0x8] sm:$0xff]
    %v61 = vld [vmem:[#allocation5 + $0x10] sm:$0xff]
    %v62 = vld [vmem:[#allocation5 + $0x18] sm:$0xff]
    %v63 = vsub.f32 %v55, %v59
    %v64 = vsub.f32 %v56, %v60
    %v65 = vsub.f32 %v57, %v61
    %v66 = vsub.f32 %v58, %v62
    %v67 = vand.u32 2147483647, %v63
    %v68 = vand.u32 2147483647, %v64
    %v69 = vand.u32 2147483647, %v65
    %v70 = vand.u32 2147483647, %v66
    %v71 = vmul.f32 %v67, 0.2
    %v72 = vmul.f32 %v68, 0.2
    %v73 = vmul.f32 %v69, 0.2
    %v74 = vmul.f32 %v70, 0.2
    %v75 = vsub.f32 0.2, %v71
    %v76 = vsub.f32 0.2, %v72
    %v77 = vsub.f32 0.2, %v73
    %v78 = vsub.f32 0.2, %v74
    %v79 = vmul.f32 %v75, 1.442695
    %v80 = vpow.pop %v79
    %v81 = vmul.f32 %v76, 1.442695
    %v82 = vpow.pop %v81
    %v83 = vmul.f32 %v77, 1.442695
    %v84 = vpow.pop %v83
    %v85 = vmul.f32 %v78, 1.442695
    %v86 = vpow.pop %v85
    %v87 = vadd.f32 %v80, 1.0
    %v88 = vadd.f32 %v82, 1.0
    %v89 = vadd.f32 %v84, 1.0
    %v90 = vadd.f32 %v86, 1.0
    %v91 = vrcp.pop %v87
    %v92 = vrcp.pop %v88
    %v93 = vrcp.pop %v89
    %v94 = vrcp.pop %v90
    %v95 = vmul.f32 %v67, %v67
    %v96 = vmul.f32 %v68, %v68
    %v97 = vmul.f32 %v69, %v69
    %v98 = vmul.f32 %v70, %v70
    %v99 = vmul.f32 %v95, %v91
    %v100 = vmul.f32 %v96, %v92
    %v101 = vmul.f32 %v97, %v93
    %v102 = vmul.f32 %v98, %v94
    %v103 = vrot.slane %v99, 4
    %v104 = vadd.f32 %v99, %v103
    %v105 = vrot.slane %v104, 2
    %v106 = vadd.f32 %v104, %v105
    %v107 = vrot.slane %v106, 1
    %v108 = vadd.f32 %v106, %v107
    %v109 = vrot.slane %v100, 4
    %v110 = vadd.f32 %v100, %v109
    %v111 = vrot.slane %v110, 2
    %v112 = vadd.f32 %v110, %v111
    %v113 = vrot.slane %v112, 1
    %v114 = vadd.f32 %v112, %v113
    %v115 = vrot.slane %v101, 4
    %v116 = vadd.f32 %v101, %v115
    %v117 = vrot.slane %v116, 2
    %v118 = vadd.f32 %v116, %v117
    %v119 = vrot.slane %v118, 1
    %v120 = vadd.f32 %v118, %v119
    %v121 = vrot.slane %v102, 4
    %v122 = vadd.f32 %v102, %v121
    %v123 = vrot.slane %v122, 2
    %v124 = vadd.f32 %v122, %v123
    %v125 = vrot.slane %v124, 1
    %v126 = vadd.f32 %v124, %v125
    %v127 = vld [vmem:[#allocation7] sm:$0xf]
    %v132 = vcombine.low %v108, %v114
    %v133 = vcombine.low %v120, %v126
    %v135 = vunpack.c.l.s4 1966171168
    %v136 = vunpack.c.0.s8 %v135
    %v137 = vlaneseq
    %v138 = vshrl.u32 %v137, 7
    %v139 = vsub.s32 %v136, %v138
    %v140 = vrot.slane %v132, %v139
    %v142 = vunpack.c.l.s4 1966171168
    %v143 = vunpack.c.0.s8 %v142
    %v144 = vlaneseq
    %v145 = vshrl.u32 %v144, 7
    %v146 = vsub.s32 %v143, %v145
    %v147 = vrot.slane %v133, %v146
    %v148 = vcombine.low %v140, %v147
    %v150 = vunpack.c.l.s4 1966171168
    %v151 = vunpack.c.0.s8 %v150
    %v152 = vlaneseq
    %v153 = vshrl.u32 %v152, 7
    %v154 = vsub.s32 %v151, %v153
    %v155 = vrot.slane %v148, %v154
    %v157 = vadd.f32 %v127, %v155
    %v158 = vlaneseq
    %vm159 = vcmp.ge.s32.totalorder %v158, 0
    %vm160 = vcmp.lt.s32.totalorder %v158, 512
    %vm161 = vmand %vm159, %vm160
    %162 = vst.msk [vmem:[#allocation7] sm:$0xf] %vm161, %v157
    // Predicated region
    $region22: #{tpu_custom_call.1} parent=1 // pred_check
      _
    $region23: #{tpu_custom_call.1} parent=1 // pred_check_branch
      %164 = sbr.rel (0) target = $region25
    $region24: #{tpu_custom_call.1} parent=1 // pred_region
      %s166 = ssub.s32 64, 64
      %167 = vsyncadd [#allocation4], %s166
      %s169 = sshll.u32 [#allocation7], 4
      %s170 = int_to_ptr.vmem [resolvable:$true] %s169
      %172 = dma.vmem_to_hbm [thread:$0]  %s170, 64, %s2, [#allocation4]
    $region25: #{tpu_custom_call.1} parent=1 // pred_fallthru
      _
    // Predicated region
    $region26: #{tpu_custom_call.1} parent=1 // pred_check
      _
    $region27: #{tpu_custom_call.1} parent=1 // pred_check_branch
      %174 = sbr.rel (0) target = $region29
    $region28: #{tpu_custom_call.1} parent=1 // pred_region
      %175 = dma.done [#allocation4], 64
    $region29: #{tpu_custom_call.1} parent=1 // pred_fallthru
      _
    %176 = vsyncpa [#allocation3], 1
    %177 = vsyncpa [#allocation6], 1
    %178 = vsyncpa [#allocation4], 1

</llo_original>
